<compile_context>
chip_gen: v7x
topology: tpu7x:2x2x1
jax: 0.10.0
libtpu: 0.0.40
codegen_flags: <defaults>
</compile_context>

<pallas_src>
import jax
import jax.numpy as jnp
from jax.experimental import pallas as pl
from jax.experimental.pallas import tpu as pltpu


_TARGET_BLOCK_BYTES = 8 * 1024 * 1024   # ~8 MiB per streaming block


def _choose_lane(p):
    """Largest lane width in {1024,512,256,128} dividing p, else None."""
    for lane in (1024, 512, 256, 128):
        if p % lane == 0:
            return lane
    return None


def _largest_divisor_leq(n, limit):
    limit = max(1, min(n, limit))
    for d in range(limit, 0, -1):
        if n % d == 0:
            return d
    return 1


def _make_kernel(C):
    def kernel(mean_ref, inv_ref, x_ref, o_ref):
        # mean_ref / inv_ref: SMEM (C,) f32 scalars (scalar-prefetched).
        # x_ref / o_ref: VMEM tiles of shape (Nb, C, TR, L).
        for c in range(C):  # static unroll; C is small for image normalization
            x = x_ref[:, c].astype(jnp.float32)
            o_ref[:, c] = ((x - mean_ref[c]) * inv_ref[c]).astype(o_ref.dtype)
    return kernel


def normalization_forward(img, mean, std):
    """img: (N, C, H, W); mean/std: (C,). Returns (img - mean[c]) / std[c]."""
    N, C, H, W = img.shape
    P = H * W

    in_item = jnp.dtype(img.dtype).itemsize
    # PyTorch promotes (img - float32_mean) / float32_std -> at least float32.
    out_dtype = jnp.promote_types(img.dtype, jnp.float32)
    out_item = jnp.dtype(out_dtype).itemsize

    mean = jnp.asarray(mean, jnp.float32).reshape(C)
    # Exact f32 reciprocal once per channel (avoids per-element vector divide).
    inv_std = (jnp.float32(1.0) / jnp.asarray(std, jnp.float32)).reshape(C)

    # Native sublane multiple for the input dtype: 8 (f32), 16 (bf16), 32 (int8).
    sub_mult = max(8, 8 * (4 // max(1, in_item)))

    lane = _choose_lane(P)
    if lane is not None:
        # Lane-dense layout; metadata-only reshape for contiguous NCHW.
        L = lane
        R = P // L
        x = img.reshape(N, C, R, L)
    else:
        # Ragged spatial size: block's last two dims equal the full (H, W)
        # extents -> no padding / slicing round-trip through HBM.
        L = W
        R = H
        x = img

    elem_item = max(in_item, out_item)
    plane_bytes = C * R * L * elem_item   # one n's (C, R, L) slab

    if lane is not None and plane_bytes > _TARGET_BLOCK_BYTES:
        # Tile the spatial rows of the (C, R, L) slab; Nb = 1.
        Nb = 1
        tr = _TARGET_BLOCK_BYTES // (C * L * elem_item)
        TR = max(sub_mult, (tr // sub_mult) * sub_mult)
        if TR >= R:
            TR = R
            RT = 1
        else:
            RT = pl.cdiv(R, TR)   # ragged last block handled by Pallas masking
    else:
        # Whole (C, R, L) slab per n; fold a batch sub-factor into the block.
        TR = R
        RT = 1
        Nb = _largest_divisor_leq(N, _TARGET_BLOCK_BYTES // max(1, plane_bytes))

    NT = N // Nb

    # VMEM budget from actual double-buffered block sizes (+ small slack).
    block_in = Nb * C * TR * L * in_item
    block_out = Nb * C * TR * L * out_item
    vmem_limit = max(int(2 * (block_in + block_out) + (2 << 20)),
                     32 * 1024 * 1024)

    total = N * C * H * W
    cost = pl.CostEstimate(
        flops=2 * total,
        transcendentals=0,
        bytes_accessed=total * (in_item + out_item) + 2 * C * 4,
    )

    out = pl.pallas_call(
        _make_kernel(C),
        out_shape=jax.ShapeDtypeStruct((N, C, R, L), out_dtype),
        grid_spec=pltpu.PrefetchScalarGridSpec(
            num_scalar_prefetch=2,            # mean, inv_std -> SMEM
            grid=(NT, RT),
            in_specs=[
                pl.BlockSpec((Nb, C, TR, L),
                             lambda n, r, mean, inv: (n, 0, r, 0)),
            ],
            out_specs=pl.BlockSpec((Nb, C, TR, L),
                                   lambda n, r, mean, inv: (n, 0, r, 0)),
        ),
        compiler_params=pltpu.CompilerParams(
            dimension_semantics=("parallel", "parallel"),
            vmem_limit_bytes=vmem_limit,
        ),
        cost_estimate=cost,
    )(mean, inv_std, x)

    return out.reshape(N, C, H, W)


if __name__ == "__main__":
    key = jax.random.PRNGKey(0)

    # Small shapes consistent with the module: batch=2, channels=4, spatial=16.
    N, C, H, W = 2, 4, 16, 16
    img = jax.random.uniform(key, (N, C, H, W), dtype=jnp.float32)

    # Deterministic per-channel normalization constants (module __init__ args).
    mean = jnp.array([0.485, 0.456, 0.406, 0.5], dtype=jnp.float32)
    std = jnp.array([0.229, 0.224, 0.225, 0.25], dtype=jnp.float32)

    out = jax.block_until_ready(normalization_forward(img, mean, std))

    # Pure-JAX reference matching PyTorch broadcasting of (C,1,1) over NCHW.
    ref = (img - mean[None, :, None, None]) / std[None, :, None, None]
    assert out.shape == img.shape and out.dtype == img.dtype
    assert jnp.allclose(out, ref, rtol=1e-6, atol=1e-6)

    print("KERNEL_OK")
</pallas_src>

<mosaic_0001>
module attributes {stable_mosaic.version = 11 : i64} {
  func.func @kernel(%arg0: i32, %arg1: i32, %arg2: memref<4xf32, #tpu.memory_space<smem>>, %arg3: memref<4xf32, #tpu.memory_space<smem>>, %arg4: memref<2x4x1x256xf32, #tpu.memory_space<vmem>>, %arg5: memref<2x4x1x256xf32, #tpu.memory_space<vmem>>) attributes {dimension_semantics = [#tpu.dimension_semantics<parallel>, #tpu.dimension_semantics<parallel>], iteration_bounds = array<i64: 1, 1>, scalar_prefetch = 2 : i64, scratch_operands = 0 : i64, tpu.core_type = #tpu.core_type<tc>, window_params = [{transform_indices = @transform_0, window_bounds = array<i64: 2, 4, 1, 256>}, {transform_indices = @transform_1, window_bounds = array<i64: 2, 4, 1, 256>}]} {
    %c0 = arith.constant 0 : index
    %c0_0 = arith.constant 0 : index
    %c0_1 = arith.constant 0 : index
    %c0_2 = arith.constant 0 : index
    %0 = vector.load %arg4[%c0, %c0_0, %c0_1, %c0_2] : memref<2x4x1x256xf32, #tpu.memory_space<vmem>>, vector<2x1x1x256xf32>
    %1 = vector.shape_cast %0 : vector<2x1x1x256xf32> to vector<2x1x256xf32>
    %c0_3 = arith.constant 0 : index
    %2 = memref.load %arg2[%c0_3] : memref<4xf32, #tpu.memory_space<smem>>
    %3 = vector.broadcast %2 : f32 to vector<2x1x256xf32>
    %4 = arith.subf %1, %3 : vector<2x1x256xf32>
    %c0_4 = arith.constant 0 : index
    %5 = memref.load %arg3[%c0_4] : memref<4xf32, #tpu.memory_space<smem>>
    %6 = vector.broadcast %5 : f32 to vector<2x1x256xf32>
    %7 = arith.mulf %4, %6 : vector<2x1x256xf32>
    %c0_5 = arith.constant 0 : index
    %c0_6 = arith.constant 0 : index
    %c0_7 = arith.constant 0 : index
    %c0_8 = arith.constant 0 : index
    %8 = vector.load %arg5[%c0_5, %c0_6, %c0_7, %c0_8] : memref<2x4x1x256xf32, #tpu.memory_space<vmem>>, vector<2x1x1x256xf32>
    %9 = vector.shape_cast %8 : vector<2x1x1x256xf32> to vector<2x1x256xf32>
    %10 = vector.shape_cast %7 : vector<2x1x256xf32> to vector<2x1x1x256xf32>
    tpu.vector_store %arg5[%c0_5, %c0_6, %c0_7, %c0_8], %10 {strides = array<i32>} : memref<2x4x1x256xf32, #tpu.memory_space<vmem>>, vector<2x1x1x256xf32>,
    %c0_9 = arith.constant 0 : index
    %c1 = arith.constant 1 : index
    %c0_10 = arith.constant 0 : index
    %c0_11 = arith.constant 0 : index
    %11 = vector.load %arg4[%c0_9, %c1, %c0_10, %c0_11] : memref<2x4x1x256xf32, #tpu.memory_space<vmem>>, vector<2x1x1x256xf32>
    %12 = vector.shape_cast %11 : vector<2x1x1x256xf32> to vector<2x1x256xf32>
    %c1_12 = arith.constant 1 : index
    %13 = memref.load %arg2[%c1_12] : memref<4xf32, #tpu.memory_space<smem>>
    %14 = vector.broadcast %13 : f32 to vector<2x1x256xf32>
    %15 = arith.subf %12, %14 : vector<2x1x256xf32>
    %c1_13 = arith.constant 1 : index
    %16 = memref.load %arg3[%c1_13] : memref<4xf32, #tpu.memory_space<smem>>
    %17 = vector.broadcast %16 : f32 to vector<2x1x256xf32>
    %18 = arith.mulf %15, %17 : vector<2x1x256xf32>
    %c0_14 = arith.constant 0 : index
    %c1_15 = arith.constant 1 : index
    %c0_16 = arith.constant 0 : index
    %c0_17 = arith.constant 0 : index
    %19 = vector.load %arg5[%c0_14, %c1_15, %c0_16, %c0_17] : memref<2x4x1x256xf32, #tpu.memory_space<vmem>>, vector<2x1x1x256xf32>
    %20 = vector.shape_cast %19 : vector<2x1x1x256xf32> to vector<2x1x256xf32>
    %21 = vector.shape_cast %18 : vector<2x1x256xf32> to vector<2x1x1x256xf32>
    tpu.vector_store %arg5[%c0_14, %c1_15, %c0_16, %c0_17], %21 {strides = array<i32>} : memref<2x4x1x256xf32, #tpu.memory_space<vmem>>, vector<2x1x1x256xf32>,
    %c0_18 = arith.constant 0 : index
    %c2 = arith.constant 2 : index
    %c0_19 = arith.constant 0 : index
    %c0_20 = arith.constant 0 : index
    %22 = vector.load %arg4[%c0_18, %c2, %c0_19, %c0_20] : memref<2x4x1x256xf32, #tpu.memory_space<vmem>>, vector<2x1x1x256xf32>
    %23 = vector.shape_cast %22 : vector<2x1x1x256xf32> to vector<2x1x256xf32>
    %c2_21 = arith.constant 2 : index
    %24 = memref.load %arg2[%c2_21] : memref<4xf32, #tpu.memory_space<smem>>
    %25 = vector.broadcast %24 : f32 to vector<2x1x256xf32>
    %26 = arith.subf %23, %25 : vector<2x1x256xf32>
    %c2_22 = arith.constant 2 : index
    %27 = memref.load %arg3[%c2_22] : memref<4xf32, #tpu.memory_space<smem>>
    %28 = vector.broadcast %27 : f32 to vector<2x1x256xf32>
    %29 = arith.mulf %26, %28 : vector<2x1x256xf32>
    %c0_23 = arith.constant 0 : index
    %c2_24 = arith.constant 2 : index
    %c0_25 = arith.constant 0 : index
    %c0_26 = arith.constant 0 : index
    %30 = vector.load %arg5[%c0_23, %c2_24, %c0_25, %c0_26] : memref<2x4x1x256xf32, #tpu.memory_space<vmem>>, vector<2x1x1x256xf32>
    %31 = vector.shape_cast %30 : vector<2x1x1x256xf32> to vector<2x1x256xf32>
    %32 = vector.shape_cast %29 : vector<2x1x256xf32> to vector<2x1x1x256xf32>
    tpu.vector_store %arg5[%c0_23, %c2_24, %c0_25, %c0_26], %32 {strides = array<i32>} : memref<2x4x1x256xf32, #tpu.memory_space<vmem>>, vector<2x1x1x256xf32>,
    %c0_27 = arith.constant 0 : index
    %c3 = arith.constant 3 : index
    %c0_28 = arith.constant 0 : index
    %c0_29 = arith.constant 0 : index
    %33 = vector.load %arg4[%c0_27, %c3, %c0_28, %c0_29] : memref<2x4x1x256xf32, #tpu.memory_space<vmem>>, vector<2x1x1x256xf32>
    %34 = vector.shape_cast %33 : vector<2x1x1x256xf32> to vector<2x1x256xf32>
    %c3_30 = arith.constant 3 : index
    %35 = memref.load %arg2[%c3_30] : memref<4xf32, #tpu.memory_space<smem>>
    %36 = vector.broadcast %35 : f32 to vector<2x1x256xf32>
    %37 = arith.subf %34, %36 : vector<2x1x256xf32>
    %c3_31 = arith.constant 3 : index
    %38 = memref.load %arg3[%c3_31] : memref<4xf32, #tpu.memory_space<smem>>
    %39 = vector.broadcast %38 : f32 to vector<2x1x256xf32>
    %40 = arith.mulf %37, %39 : vector<2x1x256xf32>
    %c0_32 = arith.constant 0 : index
    %c3_33 = arith.constant 3 : index
    %c0_34 = arith.constant 0 : index
    %c0_35 = arith.constant 0 : index
    %41 = vector.load %arg5[%c0_32, %c3_33, %c0_34, %c0_35] : memref<2x4x1x256xf32, #tpu.memory_space<vmem>>, vector<2x1x1x256xf32>
    %42 = vector.shape_cast %41 : vector<2x1x1x256xf32> to vector<2x1x256xf32>
    %43 = vector.shape_cast %40 : vector<2x1x256xf32> to vector<2x1x1x256xf32>
    tpu.vector_store %arg5[%c0_32, %c3_33, %c0_34, %c0_35], %43 {strides = array<i32>} : memref<2x4x1x256xf32, #tpu.memory_space<vmem>>, vector<2x1x1x256xf32>,
    return
  }
  func.func @transform_0(%arg0: i32, %arg1: i32, %arg2: memref<4xf32, #tpu.memory_space<smem>>, %arg3: memref<4xf32, #tpu.memory_space<smem>>) -> (i32, i32, i32, i32) {
    %c0_i32 = arith.constant 0 : i32
    %c0_i32_0 = arith.constant 0 : i32
    %c0_i32_1 = arith.constant 0 : i32
    return %arg0, %c0_i32, %arg1, %c0_i32_0 : i32, i32, i32, i32
  }
  func.func @transform_1(%arg0: i32, %arg1: i32, %arg2: memref<4xf32, #tpu.memory_space<smem>>, %arg3: memref<4xf32, #tpu.memory_space<smem>>) -> (i32, i32, i32, i32) {
    %c0_i32 = arith.constant 0 : i32
    %c0_i32_0 = arith.constant 0 : i32
    %c0_i32_1 = arith.constant 0 : i32
    return %arg0, %c0_i32, %arg1, %c0_i32_0 : i32, i32, i32, i32
  }
}

</mosaic_0001>

<llo_original>
// kernel: tpu_custom_call.1
$region0: #{tpu_custom_call.1}
  #allocation0 [shape = 'u32[]', space=smem, size = 0x4, offset = 0x4, fixed_abs, tag = 'smem constant byte address 0x4 - core index']
  #allocation1 [shape = 'u32[144,128]{1,0:T(1,128)}', space=vmem, size = 0x12000, scoped, tag = 'internal scratch']
  #allocation2 [shape = 's32[1]{0}', space=sflag, size = 0x4, scoped, tag = 'scoped memory for tpu_custom_call.1']
  #allocation3 [shape = 'u8[512]{0}', space=smem, size = 0x200, scoped, tag = 'prefetched SMEM operand 0']
  #allocation4 [shape = 'u8[512]{0}', space=smem, size = 0x200, scoped, tag = 'prefetched SMEM operand 1']
  %s0 = inlined_call_operand.hbm [shape: f32[4], index: 0, kind: input, shape index: {}]
  %s1 = inlined_call_operand.vmem [shape: f32[4], index: 1, kind: input, shape index: {}]
  %s2 = inlined_call_operand.hbm [shape: f32[2,4,1,256], index: 2, kind: input, shape index: {}]
  %s3 = inlined_call_operand.hbm [shape: f32[2,4,1,256], index: 3, kind: output, shape index: {}]
  %s4 = sld [smem:[#allocation0]]
  $region18: #{tpu_custom_call.1} parent=0
    _
  %s6 = ssub.s32 1, %s4
  %s7 = scalar_select 0, %s6, %s4
  %9 = dma.hbm_to_smem %s0, 16, [#allocation3], [#allocation2]
  %s10 = sshll.u32 %s1, 4
  %s11 = int_to_ptr.vmem [resolvable:$true] %s10
  %13 = dma.vmem_to_smem %s11, 16, [#allocation4], [#allocation2]
  %14 = dma.done [#allocation2], 32
  %15 = sfence
  $region1: #{tpu_custom_call.1} parent=0
    #allocation5 [shape = 'u8[8192]{0}', space=vmem, size = 0x2000, scoped, tag = 'input window, operand 2, single buffered']
    #allocation6 [shape = 's32[1]{0}', space=sflag, size = 0x4, scoped, tag = 'scoped memory for tpu_custom_call.1']
    #allocation7 [shape = 's32[1]{0}', space=sflag, size = 0x4, scoped, tag = 'scoped memory for tpu_custom_call.1']
    #allocation8 [shape = 'u8[8192]{0}', space=vmem, size = 0x2000, scoped, tag = 'output window, operand 0, single buffered']
    %16 = vsyncpa [#allocation6], 0
    %17 = vsyncpa [#allocation7], 0
    // Predicated region
    $region2: #{tpu_custom_call.1} parent=1 // pred_check
      _
    $region3: #{tpu_custom_call.1} parent=1 // pred_check_branch
      %19 = sbr.rel (0) target = $region5
    $region4: #{tpu_custom_call.1} parent=1 // pred_region
      %s21 = ssub.s32 256, 256
      %22 = vsyncadd [#allocation6], %s21
      %s23 = sshll.u32 [#allocation5], 4
      %s24 = int_to_ptr.vmem [resolvable:$true] %s23
      %29 = dma.hbm_to_vmem [thread:$0]  %s2, 256, %s24, [#allocation6], 32, 32, 2
    $region5: #{tpu_custom_call.1} parent=1 // pred_fallthru
      _
    // Predicated region
    $region6: #{tpu_custom_call.1} parent=1 // pred_check
      _
    $region7: #{tpu_custom_call.1} parent=1 // pred_check_branch
      %31 = sbr.rel (0) target = $region9
    $region8: #{tpu_custom_call.1} parent=1 // pred_region
      %32 = dma.done [#allocation6], 256
    $region9: #{tpu_custom_call.1} parent=1 // pred_fallthru
      _
    %v33 = vld [vmem:[#allocation5] sm:$0x3]
    %v34 = vld [vmem:[#allocation5 + $0x8] sm:$0x3]
    %s35 = sld [smem:[#allocation3]]
    %v36 = vstv %s35
    %v37 = vsub.f32 %v33, %v36
    %v38 = vsub.f32 %v34, %v36
    %s39 = sld [smem:[#allocation4]]
    %v40 = vstv %s39
    %v41 = vmul.f32 %v37, %v40
    %v42 = vmul.f32 %v38, %v40
    %v43 = vlaneseq
    %vm44 = vcmp.ge.s32.totalorder %v43, 0
    %vm45 = vcmp.lt.s32.totalorder %v43, 256
    %vm46 = vmand %vm44, %vm45
    %47 = vst.msk [vmem:[#allocation8] sm:$0x3] %vm46, %v41
    %48 = vst.msk [vmem:[#allocation8 + $0x8] sm:$0x3] %vm46, %v42
    %s49 = scalar_lea.vmem [#allocation5], 2
    %v50 = vld [vmem:[%s49] sm:$0x3]
    %v51 = vld [vmem:[%s49 + $0x8] sm:$0x3]
    %s52 = sld [smem:[#allocation3 + $0x1]]
    %v53 = vstv %s52
    %v54 = vsub.f32 %v50, %v53
    %v55 = vsub.f32 %v51, %v53
    %s56 = sld [smem:[#allocation4 + $0x1]]
    %v57 = vstv %s56
    %v58 = vmul.f32 %v54, %v57
    %v59 = vmul.f32 %v55, %v57
    %s60 = scalar_lea.vmem [#allocation8], 2
    %61 = vst.msk [vmem:[%s60] sm:$0x3] %vm46, %v58
    %62 = vst.msk [vmem:[%s60 + $0x8] sm:$0x3] %vm46, %v59
    %s63 = scalar_lea.vmem [#allocation5], 4
    %v64 = vld [vmem:[%s63] sm:$0x3]
    %v65 = vld [vmem:[%s63 + $0x8] sm:$0x3]
    %s66 = sld [smem:[#allocation3 + $0x2]]
    %v67 = vstv %s66
    %v68 = vsub.f32 %v64, %v67
    %v69 = vsub.f32 %v65, %v67
    %s70 = sld [smem:[#allocation4 + $0x2]]
    %v71 = vstv %s70
    %v72 = vmul.f32 %v68, %v71
    %v73 = vmul.f32 %v69, %v71
    %s74 = scalar_lea.vmem [#allocation8], 4
    %75 = vst.msk [vmem:[%s74] sm:$0x3] %vm46, %v72
    %76 = vst.msk [vmem:[%s74 + $0x8] sm:$0x3] %vm46, %v73
    %s77 = scalar_lea.vmem [#allocation5], 6
    %v78 = vld [vmem:[%s77] sm:$0x3]
    %v79 = vld [vmem:[%s77 + $0x8] sm:$0x3]
    %s80 = sld [smem:[#allocation3 + $0x3]]
    %v81 = vstv %s80
    %v82 = vsub.f32 %v78, %v81
    %v83 = vsub.f32 %v79, %v81
    %s84 = sld [smem:[#allocation4 + $0x3]]
    %v85 = vstv %s84
    %v86 = vmul.f32 %v82, %v85
    %v87 = vmul.f32 %v83, %v85
    %s88 = scalar_lea.vmem [#allocation8], 6
    %89 = vst.msk [vmem:[%s88] sm:$0x3] %vm46, %v86
    %90 = vst.msk [vmem:[%s88 + $0x8] sm:$0x3] %vm46, %v87
    // Predicated region
    $region10: #{tpu_custom_call.1} parent=1 // pred_check
      _
    $region11: #{tpu_custom_call.1} parent=1 // pred_check_branch
      %92 = sbr.rel (0) target = $region13
    $region12: #{tpu_custom_call.1} parent=1 // pred_region
      %s94 = ssub.s32 256, 256
      %95 = vsyncadd [#allocation7], %s94
      %s96 = sshll.u32 [#allocation8], 4
      %s97 = int_to_ptr.vmem [resolvable:$true] %s96
      %102 = dma.vmem_to_hbm [thread:$0]  %s97, 256, %s3, [#allocation7], 32, 32, 2
    $region13: #{tpu_custom_call.1} parent=1 // pred_fallthru
      _
    // Predicated region
    $region14: #{tpu_custom_call.1} parent=1 // pred_check
      _
    $region15: #{tpu_custom_call.1} parent=1 // pred_check_branch
      %104 = sbr.rel (0) target = $region17
    $region16: #{tpu_custom_call.1} parent=1 // pred_region
      %105 = dma.done [#allocation7], 256
    $region17: #{tpu_custom_call.1} parent=1 // pred_fallthru
      _
    %106 = vsyncpa [#allocation6], 1
    %107 = vsyncpa [#allocation7], 1

</llo_original>
